<compile_context>
chip_gen: v5e
topology: v5e:2x2
jax: 0.10.0
libtpu: 0.0.40
codegen_flags: <defaults>
</compile_context>

<pallas_src>
import functools

import jax
import jax.numpy as jnp
from jax.experimental import pallas as pl
from jax.experimental.pallas import tpu as pltpu


# ---------------------------------------------------------------------------
# Conv-as-banded-matmul helpers
# ---------------------------------------------------------------------------
def _build_fold_weights(w_oihw, W, C, fold):
    """3x3 conv (padding=1, no bias) as three (L, L) banded matrices, L=fold*W*C.

    out_slab[r] = in_slab[r-1] @ B[0] + in_slab[r] @ B[1] + in_slab[r+1] @ B[2]
    where slab row r holds `fold` consecutive NHWC image rows flattened into the
    lane axis, and out-of-image neighbour slab rows are zero (masked in-kernel).
    Width zero-padding is folded into edge-truncated bands (shifted identities),
    so no padded copy of the activation is ever materialized.
    NOTE: band size is O((fold*W*C)^2); for large W*C switch to a K-blocked band.
    """
    wk = jnp.transpose(w_oihw, (2, 3, 1, 0)).astype(jnp.float32)  # (kh, kw, ci, co)
    WC = W * C
    band = []
    for kh in range(3):
        b = jnp.zeros((WC, WC), jnp.float32)
        for kw in range(3):
            # nonzero at (w_in, w_out) with w_in = w_out + kw - 1, truncated at edges
            b = b + jnp.kron(jnp.eye(W, k=1 - kw, dtype=jnp.float32), wk[kh, kw])
        band.append(b)
    L = fold * WC
    Bs = [jnp.zeros((L, L), jnp.float32) for _ in range(3)]
    for a in range(fold):            # output sub-row within the slab row
        for kh in range(3):
            g = a + kh - 1           # input image-row offset relative to slab start
            delta, b_sub = g // fold, g % fold
            Bs[delta + 1] = Bs[delta + 1].at[
                b_sub * WC:(b_sub + 1) * WC, a * WC:(a + 1) * WC].add(band[kh])
    return jnp.stack(Bs)             # (3, L, L) float32


def _conv_rows(x, b_ref, rows_per_image, compute_dtype):
    """x: (TM, L) f32 block of image-aligned slab rows.  Returns (TM, L) f32 conv."""
    tm, lanes = x.shape
    if tm == 1:
        x_up = jnp.zeros_like(x)
        x_dn = jnp.zeros_like(x)
    else:
        zrow = jnp.zeros((1, lanes), x.dtype)
        x_up = jnp.concatenate([zrow, x[:tm - 1, :]], axis=0)   # x_up[i] = x[i-1]
        x_dn = jnp.concatenate([x[1:, :], zrow], axis=0)        # x_dn[i] = x[i+1]
    # Zero the neighbours across per-image boundaries inside the tile (tiles are
    # image-aligned, so the tile edge is also an image edge -> already zero).
    rid = jax.lax.broadcasted_iota(jnp.int32, x.shape, 0) % rows_per_image
    x_up = jnp.where(rid == 0, jnp.zeros_like(x), x_up)
    x_dn = jnp.where(rid == rows_per_image - 1, jnp.zeros_like(x), x_dn)

    cd = compute_dtype
    acc = jnp.dot(x_up.astype(cd), b_ref[0], preferred_element_type=jnp.float32)
    acc = acc + jnp.dot(x.astype(cd), b_ref[1], preferred_element_type=jnp.float32)
    acc = acc + jnp.dot(x_dn.astype(cd), b_ref[2], preferred_element_type=jnp.float32)
    return acc


# ---------------------------------------------------------------------------
# Kernels
# ---------------------------------------------------------------------------
def _conv_stats_kernel(x_ref, b_ref, stats_ref, *, rows_per_image, compute_dtype):
    # Pass 1: conv (not written back) + per-tile partial BN statistics.
    conv = _conv_rows(x_ref[...], b_ref, rows_per_image, compute_dtype)   # (TM, L) f32
    s1 = jnp.sum(conv, axis=0, keepdims=True)                             # (1, L)
    s2 = jnp.sum(conv * conv, axis=0, keepdims=True)                      # (1, L)
    stats_ref[...] = jnp.concatenate([s1, s2], axis=0)[None]              # one store


def _conv_bn_relu_add_kernel(x_ref, b_ref, scale_ref, shift_ref, out_ref, *,
                             rows_per_image, compute_dtype):
    # Pass 2: recompute conv, normalize with precomputed scale/shift, ReLU, +x.
    x = x_ref[...]
    conv = _conv_rows(x, b_ref, rows_per_image, compute_dtype)
    bn = conv * scale_ref[...] + shift_ref[...]
    out_ref[...] = jnp.maximum(bn, 0.0) + x


# ---------------------------------------------------------------------------
# Tiling / budget helpers (host-side, static)
# ---------------------------------------------------------------------------
def _choose_fold(H, W, C):
    """Fold spatial rows into the lane axis until it is >= 128 lanes."""
    fold = 1
    for cand in (1, 2, 4, 8):
        if H % cand != 0:
            continue
        fold = cand
        if cand * W * C >= 128:
            break
    return fold


def _pick_tile_rows(total_rows, rows_per_image, max_rows):
    """Largest image-aligned row tile dividing total_rows, <= max_rows, and
    sublane-friendly (multiple of 8 or equal to the full extent)."""
    kmax = max(1, min(total_rows // rows_per_image, max_rows // rows_per_image))
    for k in range(kmax, 0, -1):
        tm = k * rows_per_image
        if total_rows % tm == 0 and (tm % 8 == 0 or tm == total_rows):
            return tm
    return total_rows


def _vmem_budget_bytes():
    """Per-kernel VMEM budget from the actual chip (v5e/v6e 128 MiB, v7x 64 MiB),
    with ~25% headroom; conservative (v7x-safe) fallback if the query fails."""
    try:
        info = pltpu.get_tpu_info()
        cap = int(getattr(info, "vmem_capacity_bytes", 0))
        if cap > 0:
            return (cap * 3) // 4
    except Exception:
        pass
    return 48 * 1024 * 1024


# ---------------------------------------------------------------------------
# Forward pass
# ---------------------------------------------------------------------------
@functools.partial(
    jax.jit, static_argnames=("fold", "tile_rows", "vmem_limit", "compute_dtype"))
def _resblock_impl(x_nchw, w_oihw, gamma, beta, *, fold, tile_rows, vmem_limit,
                   compute_dtype):
    N, C, H, W = x_nchw.shape
    F = fold
    R = H // F                     # slab rows per image
    L = F * W * C                  # lane width (multiple of 128 when possible)
    NR = N * R                     # total slab rows: batch folded into matmul M
    TM = tile_rows
    T = NR // TM
    itemsize = jnp.dtype(compute_dtype).itemsize

    # Layout glue: NCHW -> folded lane-dense slabs.  One transpose, no padding.
    # TODO(synk): accept NHWC activations at the call site to drop this transpose
    # (and the inverse below); it is pure HBM-bound relayout outside the kernel.
    x2 = jnp.transpose(x_nchw, (0, 2, 3, 1)).astype(jnp.float32).reshape(NR, L)

    bstack = _build_fold_weights(w_oihw, W, C, F).astype(compute_dtype)   # (3, L, L)

    matmul_flops = 2 * NR * L * L * 3
    cparams = pltpu.CompilerParams(
        dimension_semantics=("parallel",), vmem_limit_bytes=vmem_limit)

    # ---- Pass 1: per-tile partial sum / sum-of-squares of the conv output ----
    stats = pl.pallas_call(
        functools.partial(_conv_stats_kernel, rows_per_image=R,
                          compute_dtype=compute_dtype),
        out_shape=jax.ShapeDtypeStruct((T, 2, L), jnp.float32),
        grid=(T,),
        in_specs=[
            pl.BlockSpec((TM, L), lambda t: (t, 0)),
            pl.BlockSpec((3, L, L), lambda t: (0, 0, 0)),
        ],
        out_specs=pl.BlockSpec((1, 2, L), lambda t: (t, 0, 0)),
        compiler_params=cparams,
        cost_estimate=pl.CostEstimate(
            flops=matmul_flops + 3 * NR * L, transcendentals=0,
            bytes_accessed=4 * NR * L + itemsize * 3 * L * L + 4 * T * 2 * L),
    )(x2, bstack)

    # ---- Finalize global batch statistics (tiny glue) ----
    count = N * H * W
    sums = jnp.sum(stats, axis=0)                          # (2, L)
    per_c = jnp.sum(sums.reshape(2, F * W, C), axis=1)     # (2, C)
    mean = per_c[0] / count
    # E[x^2]-E[x]^2 clamped >= 0 to guard against cancellation before rsqrt.
    var = jnp.maximum(per_c[1] / count - mean * mean, 0.0)
    inv = jax.lax.rsqrt(var + 1e-5)
    scale_c = gamma.astype(jnp.float32) * inv
    shift_c = beta.astype(jnp.float32) - mean * scale_c
    scale_row = jnp.tile(scale_c, F * W).reshape(1, L)
    shift_row = jnp.tile(shift_c, F * W).reshape(1, L)

    # ---- Pass 2: recompute conv + BN + ReLU + residual add (streamed) ----
    out2 = pl.pallas_call(
        functools.partial(_conv_bn_relu_add_kernel, rows_per_image=R,
                          compute_dtype=compute_dtype),
        out_shape=jax.ShapeDtypeStruct((NR, L), jnp.float32),
        grid=(T,),
        in_specs=[
            pl.BlockSpec((TM, L), lambda t: (t, 0)),
            pl.BlockSpec((3, L, L), lambda t: (0, 0, 0)),
            pl.BlockSpec((1, L), lambda t: (0, 0)),
            pl.BlockSpec((1, L), lambda t: (0, 0)),
        ],
        out_specs=pl.BlockSpec((TM, L), lambda t: (t, 0)),
        compiler_params=cparams,
        cost_estimate=pl.CostEstimate(
            flops=matmul_flops + 5 * NR * L, transcendentals=0,
            bytes_accessed=2 * 4 * NR * L + itemsize * 3 * L * L + 8 * L),
    )(x2, bstack, scale_row, shift_row)

    out_nhwc = out2.reshape(N, H, W, C)
    return jnp.transpose(out_nhwc, (0, 3, 1, 2))           # back to NCHW


def resblock_forward(x_nchw, w_oihw, gamma, beta, *,
                     compute_dtype=jnp.float32, max_rows_per_tile=512):
    """x_nchw: (N, C, H, W) f32; w_oihw: (C, C, 3, 3); gamma/beta: (C,).

    compute_dtype=jnp.bfloat16 is recommended on v6e/v7x (f32 accumulation kept).
    """
    N, C, H, W = x_nchw.shape
    F = _choose_fold(H, W, C)
    R = H // F
    L = F * W * C
    NR = N * R

    budget = _vmem_budget_bytes()
    itemsize = jnp.dtype(compute_dtype).itemsize
    weight_bytes = 2 * 3 * L * L * itemsize            # double-buffered banded weights
    per_row_bytes = 2 * 2 * L * 4 + 8 * L * 4          # streamed blocks + in-kernel temps
    budget_rows = max(R, (budget - weight_bytes - (4 << 20)) // per_row_bytes)
    max_rows = max(R, min(int(max_rows_per_tile), int(budget_rows)))
    tile_rows = _pick_tile_rows(NR, R, max_rows)

    return _resblock_impl(x_nchw, w_oihw, gamma, beta, fold=F, tile_rows=tile_rows,
                          vmem_limit=int(budget), compute_dtype=compute_dtype)


# ---------------------------------------------------------------------------
# Pure-JAX reference mirroring the PyTorch forward (training-mode BN)
# ---------------------------------------------------------------------------
def _reference(x_nchw, w_oihw, gamma, beta):
    conv = jax.lax.conv_general_dilated(
        x_nchw, w_oihw, window_strides=(1, 1), padding=((1, 1), (1, 1)),
        dimension_numbers=("NCHW", "OIHW", "NCHW"))
    mean = jnp.mean(conv, axis=(0, 2, 3), keepdims=True)
    var = jnp.mean((conv - mean) ** 2, axis=(0, 2, 3), keepdims=True)
    bn = (conv - mean) * jax.lax.rsqrt(var + 1e-5)
    bn = bn * gamma.reshape(1, -1, 1, 1) + beta.reshape(1, -1, 1, 1)
    return jnp.maximum(bn, 0.0) + x_nchw


if __name__ == "__main__":
    N, C, H, W = 2, 4, 16, 16
    key = jax.random.PRNGKey(0)
    kx, kw_ = jax.random.split(key)

    x = jax.random.normal(kx, (N, C, H, W), dtype=jnp.float32)

    # kaiming_normal_(nonlinearity='relu'): std = sqrt(2 / fan_in), fan_in = C*3*3
    fan_in = C * 3 * 3
    w = jax.random.normal(kw_, (C, C, 3, 3), dtype=jnp.float32) * jnp.sqrt(2.0 / fan_in)
    gamma = jnp.full((C,), 0.5, dtype=jnp.float32)   # BN weight init 0.5
    beta = jnp.zeros((C,), dtype=jnp.float32)        # BN bias init 0.0

    ref = _reference(x, w, gamma, beta)

    # f32 path, default tiling: batch folded into a single big row tile (grid=1).
    out = resblock_forward(x, w, gamma, beta)
    jax.block_until_ready(out)
    assert out.shape == (N, C, H, W)
    assert jnp.allclose(out, ref, rtol=1e-3, atol=1e-3), "f32 mismatch vs reference"

    # f32 path, forced multi-tile grid (one image per row tile) to exercise the
    # tiled per-tile-stats / index_map path.
    out_tiled = resblock_forward(x, w, gamma, beta, max_rows_per_tile=8)
    jax.block_until_ready(out_tiled)
    assert jnp.allclose(out_tiled, ref, rtol=1e-3, atol=1e-3), "tiled mismatch"

    # bf16 matmul operands (v6e/v7x recommendation); f32 accumulation.  Loose
    # tolerance only accounts for bf16 operand rounding.
    out_bf16 = resblock_forward(x, w, gamma, beta, compute_dtype=jnp.bfloat16)
    jax.block_until_ready(out_bf16)
    assert jnp.allclose(out_bf16, ref, rtol=1e-1, atol=1e-1), "bf16 mismatch"

    print("KERNEL_OK")
</pallas_src>

<mosaic_0001>
module attributes {stable_mosaic.version = 11 : i64} {
  func.func @_conv_stats_kernel(%arg0: i32, %arg1: memref<16x128xf32, #tpu.memory_space<vmem>>, %arg2: memref<3x128x128xf32, #tpu.memory_space<vmem>>, %arg3: memref<1x2x128xf32, #tpu.memory_space<vmem>>) attributes {dimension_semantics = [#tpu.dimension_semantics<parallel>], iteration_bounds = array<i64: 1>, scalar_prefetch = 0 : i64, scratch_operands = 0 : i64, tpu.core_type = #tpu.core_type<tc>, window_params = [{transform_indices = @transform_0, window_bounds = array<i64: 16, 128>}, {pipeline_mode = #tpu.pipeline_mode<synchronous>, transform_indices = @transform_1, window_bounds = array<i64: 3, 128, 128>}, {transform_indices = @transform_2, window_bounds = array<i64: 1, 2, 128>}]} {
    %c0 = arith.constant 0 : index
    %c0_0 = arith.constant 0 : index
    %0 = vector.load %arg1[%c0, %c0_0] : memref<16x128xf32, #tpu.memory_space<vmem>>, vector<16x128xf32>
    %cst = arith.constant 0.000000e+00 : f32
    %1 = vector.broadcast %cst : f32 to vector<1x128xf32>
    %2 = vector.extract_strided_slice %0 {offsets = [0, 0], sizes = [15, 128], strides = [1, 1]} : vector<16x128xf32> to vector<15x128xf32>
    %3 = tpu.concatenate %1, %2 in 0 : vector<1x128xf32>, vector<15x128xf32> -> vector<16x128xf32>
    %4 = vector.extract_strided_slice %0 {offsets = [1, 0], sizes = [15, 128], strides = [1, 1]} : vector<16x128xf32> to vector<15x128xf32>
    %5 = tpu.concatenate %4, %1 in 0 : vector<15x128xf32>, vector<1x128xf32> -> vector<16x128xf32>
    %6 = tpu.iota {dimensions = array<i32: 0>} : vector<16x128xi32>
    %c8_i32 = arith.constant 8 : i32
    %c0_i32 = arith.constant 0 : i32
    %7 = arith.cmpi eq, %c8_i32, %c0_i32 : i32
    %c1_i32 = arith.constant 1 : i32
    %8 = arith.select %7, %c1_i32, %c8_i32 : i32
    %9 = vector.broadcast %8 : i32 to vector<16x128xi32>
    %10 = arith.remsi %6, %9 : vector<16x128xi32>
    %c0_i32_1 = arith.constant 0 : i32
    %11 = vector.broadcast %c0_i32_1 : i32 to vector<16x128xi32>
    %12 = arith.cmpi ne, %10, %11 : vector<16x128xi32>
    %c0_i32_2 = arith.constant 0 : i32
    %13 = vector.broadcast %c0_i32_2 : i32 to vector<16x128xi32>
    %14 = arith.cmpi slt, %10, %13 : vector<16x128xi32>
    %c0_i32_3 = arith.constant 0 : i32
    %15 = arith.cmpi slt, %8, %c0_i32_3 : i32
    %16 = vector.broadcast %15 : i1 to vector<16x128xi1>
    %17 = vector.broadcast %16 : vector<16x128xi1> to vector<16x128xi1>
    %18 = arith.xori %14, %17 : vector<16x128xi1>
    %19 = arith.andi %18, %12 : vector<16x128xi1>
    %20 = vector.broadcast %8 : i32 to vector<16x128xi32>
    %21 = arith.addi %10, %20 : vector<16x128xi32>
    %22 = arith.select %19, %21, %10 : vector<16x128xi1>, vector<16x128xi32>
    %c0_i32_4 = arith.constant 0 : i32
    %23 = vector.broadcast %c0_i32_4 : i32 to vector<16x128xi32>
    %24 = arith.cmpi eq, %22, %23 : vector<16x128xi32>
    %cst_5 = arith.constant 0.000000e+00 : f32
    %25 = vector.broadcast %cst_5 : f32 to vector<16x128xf32>
    %26 = arith.select %24, %25, %3 : vector<16x128xi1>, vector<16x128xf32>
    %c7_i32 = arith.constant 7 : i32
    %27 = vector.broadcast %c7_i32 : i32 to vector<16x128xi32>
    %28 = arith.cmpi eq, %22, %27 : vector<16x128xi32>
    %cst_6 = arith.constant 0.000000e+00 : f32
    %29 = vector.broadcast %cst_6 : f32 to vector<16x128xf32>
    %30 = arith.select %28, %29, %5 : vector<16x128xi1>, vector<16x128xf32>
    %c0_7 = arith.constant 0 : index
    %c0_8 = arith.constant 0 : index
    %c0_9 = arith.constant 0 : index
    %31 = vector.load %arg2[%c0_7, %c0_8, %c0_9] : memref<3x128x128xf32, #tpu.memory_space<vmem>>, vector<1x128x128xf32>
    %32 = vector.shape_cast %31 : vector<1x128x128xf32> to vector<128x128xf32>
    %cst_10 = arith.constant dense<0.000000e+00> : vector<16x128xf32>
    %33 = tpu.matmul %26, %32, %cst_10 {dimension_numbers = #tpu.dot_dimension_numbers<[1], [0], [0], [1], [0, 0, 1, 1], [], []>} : vector<16x128xf32>, vector<128x128xf32>, vector<16x128xf32> -> vector<16x128xf32>
    %c1 = arith.constant 1 : index
    %c0_11 = arith.constant 0 : index
    %c0_12 = arith.constant 0 : index
    %34 = vector.load %arg2[%c1, %c0_11, %c0_12] : memref<3x128x128xf32, #tpu.memory_space<vmem>>, vector<1x128x128xf32>
    %35 = vector.shape_cast %34 : vector<1x128x128xf32> to vector<128x128xf32>
    %cst_13 = arith.constant dense<0.000000e+00> : vector<16x128xf32>
    %36 = tpu.matmul %0, %35, %cst_13 {dimension_numbers = #tpu.dot_dimension_numbers<[1], [0], [0], [1], [0, 0, 1, 1], [], []>} : vector<16x128xf32>, vector<128x128xf32>, vector<16x128xf32> -> vector<16x128xf32>
    %37 = arith.addf %33, %36 : vector<16x128xf32>
    %c2 = arith.constant 2 : index
    %c0_14 = arith.constant 0 : index
    %c0_15 = arith.constant 0 : index
    %38 = vector.load %arg2[%c2, %c0_14, %c0_15] : memref<3x128x128xf32, #tpu.memory_space<vmem>>, vector<1x128x128xf32>
    %39 = vector.shape_cast %38 : vector<1x128x128xf32> to vector<128x128xf32>
    %cst_16 = arith.constant dense<0.000000e+00> : vector<16x128xf32>
    %40 = tpu.matmul %30, %39, %cst_16 {dimension_numbers = #tpu.dot_dimension_numbers<[1], [0], [0], [1], [0, 0, 1, 1], [], []>} : vector<16x128xf32>, vector<128x128xf32>, vector<16x128xf32> -> vector<16x128xf32>
    %41 = arith.addf %37, %40 : vector<16x128xf32>
    %cst_17 = arith.constant dense<0.000000e+00> : vector<128xf32>
    %42 = vector.multi_reduction <add>, %41, %cst_17 [0] : vector<16x128xf32> to vector<128xf32>
    %43 = vector.shape_cast %42 : vector<128xf32> to vector<1x128xf32>
    %44 = arith.mulf %41, %41 : vector<16x128xf32>
    %cst_18 = arith.constant dense<0.000000e+00> : vector<128xf32>
    %45 = vector.multi_reduction <add>, %44, %cst_18 [0] : vector<16x128xf32> to vector<128xf32>
    %46 = vector.shape_cast %45 : vector<128xf32> to vector<1x128xf32>
    %47 = tpu.concatenate %43, %46 in 0 : vector<1x128xf32>, vector<1x128xf32> -> vector<2x128xf32>
    %48 = vector.shape_cast %47 : vector<2x128xf32> to vector<1x2x128xf32>
    %c0_19 = arith.constant 0 : index
    %c0_20 = arith.constant 0 : index
    %c0_21 = arith.constant 0 : index
    %49 = vector.load %arg3[%c0_19, %c0_20, %c0_21] : memref<1x2x128xf32, #tpu.memory_space<vmem>>, vector<1x2x128xf32>
    tpu.vector_store %arg3[%c0_19, %c0_20, %c0_21], %48 {strides = array<i32>} : memref<1x2x128xf32, #tpu.memory_space<vmem>>, vector<1x2x128xf32>,
    return
  }
  func.func @transform_0(%arg0: i32) -> (i32, i32) {
    %c0_i32 = arith.constant 0 : i32
    %c0_i32_0 = arith.constant 0 : i32
    return %arg0, %c0_i32 : i32, i32
  }
  func.func @transform_1(%arg0: i32) -> (i32, i32, i32) {
    %c0_i32 = arith.constant 0 : i32
    %c0_i32_0 = arith.constant 0 : i32
    %c0_i32_1 = arith.constant 0 : i32
    %c0_i32_2 = arith.constant 0 : i32
    return %c0_i32, %c0_i32_0, %c0_i32_1 : i32, i32, i32
  }
  func.func @transform_2(%arg0: i32) -> (i32, i32, i32) {
    %c0_i32 = arith.constant 0 : i32
    %c0_i32_0 = arith.constant 0 : i32
    %c0_i32_1 = arith.constant 0 : i32
    return %arg0, %c0_i32, %c0_i32_0 : i32, i32, i32
  }
}

module attributes {stable_mosaic.version = 11 : i64} {
  func.func @_conv_bn_relu_add_kernel(%arg0: i32, %arg1: memref<16x128xf32, #tpu.memory_space<vmem>>, %arg2: memref<3x128x128xf32, #tpu.memory_space<vmem>>, %arg3: memref<1x128xf32, #tpu.memory_space<vmem>>, %arg4: memref<1x128xf32, #tpu.memory_space<vmem>>, %arg5: memref<16x128xf32, #tpu.memory_space<vmem>>) attributes {dimension_semantics = [#tpu.dimension_semantics<parallel>], iteration_bounds = array<i64: 1>, scalar_prefetch = 0 : i64, scratch_operands = 0 : i64, tpu.core_type = #tpu.core_type<tc>, window_params = [{transform_indices = @transform_0, window_bounds = array<i64: 16, 128>}, {pipeline_mode = #tpu.pipeline_mode<synchronous>, transform_indices = @transform_1, window_bounds = array<i64: 3, 128, 128>}, {pipeline_mode = #tpu.pipeline_mode<synchronous>, transform_indices = @transform_2, window_bounds = array<i64: 1, 128>}, {pipeline_mode = #tpu.pipeline_mode<synchronous>, transform_indices = @transform_3, window_bounds = array<i64: 1, 128>}, {transform_indices = @transform_4, window_bounds = array<i64: 16, 128>}]} {
    %c0 = arith.constant 0 : index
    %c0_0 = arith.constant 0 : index
    %0 = vector.load %arg1[%c0, %c0_0] : memref<16x128xf32, #tpu.memory_space<vmem>>, vector<16x128xf32>
    %cst = arith.constant 0.000000e+00 : f32
    %1 = vector.broadcast %cst : f32 to vector<1x128xf32>
    %2 = vector.extract_strided_slice %0 {offsets = [0, 0], sizes = [15, 128], strides = [1, 1]} : vector<16x128xf32> to vector<15x128xf32>
    %3 = tpu.concatenate %1, %2 in 0 : vector<1x128xf32>, vector<15x128xf32> -> vector<16x128xf32>
    %4 = vector.extract_strided_slice %0 {offsets = [1, 0], sizes = [15, 128], strides = [1, 1]} : vector<16x128xf32> to vector<15x128xf32>
    %5 = tpu.concatenate %4, %1 in 0 : vector<15x128xf32>, vector<1x128xf32> -> vector<16x128xf32>
    %6 = tpu.iota {dimensions = array<i32: 0>} : vector<16x128xi32>
    %c8_i32 = arith.constant 8 : i32
    %c0_i32 = arith.constant 0 : i32
    %7 = arith.cmpi eq, %c8_i32, %c0_i32 : i32
    %c1_i32 = arith.constant 1 : i32
    %8 = arith.select %7, %c1_i32, %c8_i32 : i32
    %9 = vector.broadcast %8 : i32 to vector<16x128xi32>
    %10 = arith.remsi %6, %9 : vector<16x128xi32>
    %c0_i32_1 = arith.constant 0 : i32
    %11 = vector.broadcast %c0_i32_1 : i32 to vector<16x128xi32>
    %12 = arith.cmpi ne, %10, %11 : vector<16x128xi32>
    %c0_i32_2 = arith.constant 0 : i32
    %13 = vector.broadcast %c0_i32_2 : i32 to vector<16x128xi32>
    %14 = arith.cmpi slt, %10, %13 : vector<16x128xi32>
    %c0_i32_3 = arith.constant 0 : i32
    %15 = arith.cmpi slt, %8, %c0_i32_3 : i32
    %16 = vector.broadcast %15 : i1 to vector<16x128xi1>
    %17 = vector.broadcast %16 : vector<16x128xi1> to vector<16x128xi1>
    %18 = arith.xori %14, %17 : vector<16x128xi1>
    %19 = arith.andi %18, %12 : vector<16x128xi1>
    %20 = vector.broadcast %8 : i32 to vector<16x128xi32>
    %21 = arith.addi %10, %20 : vector<16x128xi32>
    %22 = arith.select %19, %21, %10 : vector<16x128xi1>, vector<16x128xi32>
    %c0_i32_4 = arith.constant 0 : i32
    %23 = vector.broadcast %c0_i32_4 : i32 to vector<16x128xi32>
    %24 = arith.cmpi eq, %22, %23 : vector<16x128xi32>
    %cst_5 = arith.constant 0.000000e+00 : f32
    %25 = vector.broadcast %cst_5 : f32 to vector<16x128xf32>
    %26 = arith.select %24, %25, %3 : vector<16x128xi1>, vector<16x128xf32>
    %c7_i32 = arith.constant 7 : i32
    %27 = vector.broadcast %c7_i32 : i32 to vector<16x128xi32>
    %28 = arith.cmpi eq, %22, %27 : vector<16x128xi32>
    %cst_6 = arith.constant 0.000000e+00 : f32
    %29 = vector.broadcast %cst_6 : f32 to vector<16x128xf32>
    %30 = arith.select %28, %29, %5 : vector<16x128xi1>, vector<16x128xf32>
    %c0_7 = arith.constant 0 : index
    %c0_8 = arith.constant 0 : index
    %c0_9 = arith.constant 0 : index
    %31 = vector.load %arg2[%c0_7, %c0_8, %c0_9] : memref<3x128x128xf32, #tpu.memory_space<vmem>>, vector<1x128x128xf32>
    %32 = vector.shape_cast %31 : vector<1x128x128xf32> to vector<128x128xf32>
    %cst_10 = arith.constant dense<0.000000e+00> : vector<16x128xf32>
    %33 = tpu.matmul %26, %32, %cst_10 {dimension_numbers = #tpu.dot_dimension_numbers<[1], [0], [0], [1], [0, 0, 1, 1], [], []>} : vector<16x128xf32>, vector<128x128xf32>, vector<16x128xf32> -> vector<16x128xf32>
    %c1 = arith.constant 1 : index
    %c0_11 = arith.constant 0 : index
    %c0_12 = arith.constant 0 : index
    %34 = vector.load %arg2[%c1, %c0_11, %c0_12] : memref<3x128x128xf32, #tpu.memory_space<vmem>>, vector<1x128x128xf32>
    %35 = vector.shape_cast %34 : vector<1x128x128xf32> to vector<128x128xf32>
    %cst_13 = arith.constant dense<0.000000e+00> : vector<16x128xf32>
    %36 = tpu.matmul %0, %35, %cst_13 {dimension_numbers = #tpu.dot_dimension_numbers<[1], [0], [0], [1], [0, 0, 1, 1], [], []>} : vector<16x128xf32>, vector<128x128xf32>, vector<16x128xf32> -> vector<16x128xf32>
    %37 = arith.addf %33, %36 : vector<16x128xf32>
    %c2 = arith.constant 2 : index
    %c0_14 = arith.constant 0 : index
    %c0_15 = arith.constant 0 : index
    %38 = vector.load %arg2[%c2, %c0_14, %c0_15] : memref<3x128x128xf32, #tpu.memory_space<vmem>>, vector<1x128x128xf32>
    %39 = vector.shape_cast %38 : vector<1x128x128xf32> to vector<128x128xf32>
    %cst_16 = arith.constant dense<0.000000e+00> : vector<16x128xf32>
    %40 = tpu.matmul %30, %39, %cst_16 {dimension_numbers = #tpu.dot_dimension_numbers<[1], [0], [0], [1], [0, 0, 1, 1], [], []>} : vector<16x128xf32>, vector<128x128xf32>, vector<16x128xf32> -> vector<16x128xf32>
    %41 = arith.addf %37, %40 : vector<16x128xf32>
    %c0_17 = arith.constant 0 : index
    %c0_18 = arith.constant 0 : index
    %42 = vector.load %arg3[%c0_17, %c0_18] : memref<1x128xf32, #tpu.memory_space<vmem>>, vector<1x128xf32>
    %43 = vector.broadcast %42 : vector<1x128xf32> to vector<16x128xf32>
    %44 = arith.mulf %41, %43 : vector<16x128xf32>
    %c0_19 = arith.constant 0 : index
    %c0_20 = arith.constant 0 : index
    %45 = vector.load %arg4[%c0_19, %c0_20] : memref<1x128xf32, #tpu.memory_space<vmem>>, vector<1x128xf32>
    %46 = vector.broadcast %45 : vector<1x128xf32> to vector<16x128xf32>
    %47 = arith.addf %44, %46 : vector<16x128xf32>
    %cst_21 = arith.constant 0.000000e+00 : f32
    %48 = vector.broadcast %cst_21 : f32 to vector<16x128xf32>
    %49 = arith.maximumf %47, %48 : vector<16x128xf32>
    %50 = arith.addf %49, %0 : vector<16x128xf32>
    %c0_22 = arith.constant 0 : index
    %c0_23 = arith.constant 0 : index
    %51 = vector.load %arg5[%c0_22, %c0_23] : memref<16x128xf32, #tpu.memory_space<vmem>>, vector<16x128xf32>
    tpu.vector_store %arg5[%c0_22, %c0_23], %50 {strides = array<i32>} : memref<16x128xf32, #tpu.memory_space<vmem>>, vector<16x128xf32>,
    return
  }
  func.func @transform_0(%arg0: i32) -> (i32, i32) {
    %c0_i32 = arith.constant 0 : i32
    %c0_i32_0 = arith.constant 0 : i32
    return %arg0, %c0_i32 : i32, i32
  }
  func.func @transform_1(%arg0: i32) -> (i32, i32, i32) {
    %c0_i32 = arith.constant 0 : i32
    %c0_i32_0 = arith.constant 0 : i32
    %c0_i32_1 = arith.constant 0 : i32
    %c0_i32_2 = arith.constant 0 : i32
    return %c0_i32, %c0_i32_0, %c0_i32_1 : i32, i32, i32
  }
  func.func @transform_2(%arg0: i32) -> (i32, i32) {
    %c0_i32 = arith.constant 0 : i32
    %c0_i32_0 = arith.constant 0 : i32
    %c0_i32_1 = arith.constant 0 : i32
    return %c0_i32, %c0_i32_0 : i32, i32
  }
  func.func @transform_3(%arg0: i32) -> (i32, i32) {
    %c0_i32 = arith.constant 0 : i32
    %c0_i32_0 = arith.constant 0 : i32
    %c0_i32_1 = arith.constant 0 : i32
    return %c0_i32, %c0_i32_0 : i32, i32
  }
  func.func @transform_4(%arg0: i32) -> (i32, i32) {
    %c0_i32 = arith.constant 0 : i32
    %c0_i32_0 = arith.constant 0 : i32
    return %arg0, %c0_i32 : i32, i32
  }
}

</mosaic_0001>

<llo_original>
// kernel: tile.13
$region0: #{tile.13}
  #allocation0 [shape = 's32[1]{0}', space=sflag, size = 0x4, scoped, tag = 'scoped memory for tile.13']
  %s0 = inlined_call_operand.vmem [shape: f32[4], index: 0, kind: input, shape index: {}]
  %s1 = inlined_call_operand.vmem [shape: f32[32,4], index: 1, kind: output, shape index: {}]
  // Predicated region
  $region2: #{tile.13} parent=0 // pred_check
    _
  $region3: #{tile.13} parent=0 // pred_check_branch
    %3 = sbr.rel (0) target = $region5
  $region4: #{tile.13} parent=0 // pred_region
    _
  $region5: #{tile.13} parent=0 // pred_fallthru
    _
  %v4 = vld [vmem:[%s0] ss:$0 sm:$0xff]
  %5 = vst [vmem:[%s1] sm:$0xff] %v4
  %s6 = scalar_lea.vmem %s1, 8
  %7 = vst [vmem:[%s6] sm:$0xff] %v4
  %s8 = scalar_lea.vmem %s1, 16
  %9 = vst [vmem:[%s8] sm:$0xff] %v4
  %s10 = scalar_lea.vmem %s1, 24
  %11 = vst [vmem:[%s10] sm:$0xff] %v4

// kernel: tile.14
$region0: #{tile.14}
  %s0 = inlined_call_operand.vmem [shape: f32[32,4], index: 0, kind: input, shape index: {}]
  %s1 = inlined_call_operand.vmem [shape: f32[1,128], index: 1, kind: output, shape index: {}]
  $region1: #{tile.14} parent=0
    #allocation0 [shape = 'u8[4096]{0}', space=vmem, size = 0x1000, scoped, tag = 'scoped mem for output reshape']
    %v2 = vld [vmem:[%s0] sm:$0x1]
    %vm3 = vcmask 31744
    %4 = vst.msk [vmem:[#allocation0] sm:$0x1] %vm3, %v2
    %s5 = scalar_lea.vmem %s0, 31
    %v6 = vld [vmem:[%s5] sm:$0x1]
    %7 = vrot.lane.b32.xlu0 %v6, 124
    %v8 = vpop.permute.xlu0 %7
    %vm9 = vcmask 1048544
    %10 = vst.msk [vmem:[#allocation0] sm:$0x1] %vm9, %v8
    %s11 = scalar_lea.vmem %s0, 30
    %v12 = vld [vmem:[%s11] sm:$0x1]
    %13 = vrot.lane.b32.xlu0 %v12, 120
    %v14 = vpop.permute.xlu0 %13
    %vm15 = vcmask 1015744
    %16 = vst.msk [vmem:[#allocation0] sm:$0x1] %vm15, %v14
    %s17 = scalar_lea.vmem %s0, 29
    %v18 = vld [vmem:[%s17] sm:$0x1]
    %19 = vrot.lane.b32.xlu0 %v18, 116
    %v20 = vpop.permute.xlu0 %19
    %vm21 = vcmask 982944
    %22 = vst.msk [vmem:[#allocation0] sm:$0x1] %vm21, %v20
    %s23 = scalar_lea.vmem %s0, 28
    %v24 = vld [vmem:[%s23] sm:$0x1]
    %25 = vrot.lane.b32.xlu0 %v24, 112
    %v26 = vpop.permute.xlu0 %25
    %vm27 = vcmask 950144
    %28 = vst.msk [vmem:[#allocation0] sm:$0x1] %vm27, %v26
    %s29 = scalar_lea.vmem %s0, 27
    %v30 = vld [vmem:[%s29] sm:$0x1]
    %31 = vrot.lane.b32.xlu0 %v30, 108
    %v32 = vpop.permute.xlu0 %31
    %vm33 = vcmask 917344
    %34 = vst.msk [vmem:[#allocation0] sm:$0x1] %vm33, %v32
    %s35 = scalar_lea.vmem %s0, 26
    %v36 = vld [vmem:[%s35] sm:$0x1]
    %37 = vrot.lane.b32.xlu0 %v36, 104
    %v38 = vpop.permute.xlu0 %37
    %vm39 = vcmask 884544
    %40 = vst.msk [vmem:[#allocation0] sm:$0x1] %vm39, %v38
    %s41 = scalar_lea.vmem %s0, 25
    %v42 = vld [vmem:[%s41] sm:$0x1]
    %43 = vrot.lane.b32.xlu0 %v42, 100
    %v44 = vpop.permute.xlu0 %43
    %vm45 = vcmask 851744
    %46 = vst.msk [vmem:[#allocation0] sm:$0x1] %vm45, %v44
    %s47 = scalar_lea.vmem %s0, 24
    %v48 = vld [vmem:[%s47] sm:$0x1]
    %49 = vrot.lane.b32.xlu0 %v48, 96
    %v50 = vpop.permute.xlu0 %49
    %vm51 = vcmask 818944
    %52 = vst.msk [vmem:[#allocation0] sm:$0x1] %vm51, %v50
    %s53 = scalar_lea.vmem %s0, 23
    %v54 = vld [vmem:[%s53] sm:$0x1]
    %55 = vrot.lane.b32.xlu0 %v54, 92
    %v56 = vpop.permute.xlu0 %55
    %vm57 = vcmask 786144
    %58 = vst.msk [vmem:[#allocation0] sm:$0x1] %vm57, %v56
    %s59 = scalar_lea.vmem %s0, 22
    %v60 = vld [vmem:[%s59] sm:$0x1]
    %61 = vrot.lane.b32.xlu0 %v60, 88
    %v62 = vpop.permute.xlu0 %61
    %vm63 = vcmask 753344
    %64 = vst.msk [vmem:[#allocation0] sm:$0x1] %vm63, %v62
    %s65 = scalar_lea.vmem %s0, 21
    %v66 = vld [vmem:[%s65] sm:$0x1]
    %67 = vrot.lane.b32.xlu0 %v66, 84
    %v68 = vpop.permute.xlu0 %67
    %vm69 = vcmask 720544
    %70 = vst.msk [vmem:[#allocation0] sm:$0x1] %vm69, %v68
    %s71 = scalar_lea.vmem %s0, 20
    %v72 = vld [vmem:[%s71] sm:$0x1]
    %73 = vrot.lane.b32.xlu0 %v72, 80
    %v74 = vpop.permute.xlu0 %73
    %vm75 = vcmask 687744
    %76 = vst.msk [vmem:[#allocation0] sm:$0x1] %vm75, %v74
    %s77 = scalar_lea.vmem %s0, 19
    %v78 = vld [vmem:[%s77] sm:$0x1]
    %79 = vrot.lane.b32.xlu0 %v78, 76
    %v80 = vpop.permute.xlu0 %79
    %vm81 = vcmask 654944
    %82 = vst.msk [vmem:[#allocation0] sm:$0x1] %vm81, %v80
    %s83 = scalar_lea.vmem %s0, 18
    %v84 = vld [vmem:[%s83] sm:$0x1]
    %85 = vrot.lane.b32.xlu0 %v84, 72
    %v86 = vpop.permute.xlu0 %85
    %vm87 = vcmask 622144
    %88 = vst.msk [vmem:[#allocation0] sm:$0x1] %vm87, %v86
    %s89 = scalar_lea.vmem %s0, 17
    %v90 = vld [vmem:[%s89] sm:$0x1]
    %91 = vrot.lane.b32.xlu0 %v90, 68
    %v92 = vpop.permute.xlu0 %91
    %vm93 = vcmask 589344
    %94 = vst.msk [vmem:[#allocation0] sm:$0x1] %vm93, %v92
    %s95 = scalar_lea.vmem %s0, 16
    %v96 = vld [vmem:[%s95] sm:$0x1]
    %97 = vrot.lane.b32.xlu0 %v96, 64
    %v98 = vpop.permute.xlu0 %97
    %vm99 = vcmask 556544
    %100 = vst.msk [vmem:[#allocation0] sm:$0x1] %vm99, %v98
    %s101 = scalar_lea.vmem %s0, 15
    %v102 = vld [vmem:[%s101] sm:$0x1]
    %103 = vrot.lane.b32.xlu0 %v102, 60
    %v104 = vpop.permute.xlu0 %103
    %vm105 = vcmask 523744
    %106 = vst.msk [vmem:[#allocation0] sm:$0x1] %vm105, %v104
    %s107 = scalar_lea.vmem %s0, 14
    %v108 = vld [vmem:[%s107] sm:$0x1]
    %109 = vrot.lane.b32.xlu0 %v108, 56
    %v110 = vpop.permute.xlu0 %109
    %vm111 = vcmask 490944
    %112 = vst.msk [vmem:[#allocation0] sm:$0x1] %vm111, %v110
    %s113 = scalar_lea.vmem %s0, 13
    %v114 = vld [vmem:[%s113] sm:$0x1]
    %115 = vrot.lane.b32.xlu0 %v114, 52
    %v116 = vpop.permute.xlu0 %115
    %vm117 = vcmask 458144
    %118 = vst.msk [vmem:[#allocation0] sm:$0x1] %vm117, %v116
    %s119 = scalar_lea.vmem %s0, 12
    %v120 = vld [vmem:[%s119] sm:$0x1]
    %121 = vrot.lane.b32.xlu0 %v120, 48
    %v122 = vpop.permute.xlu0 %121
    %vm123 = vcmask 425344
    %124 = vst.msk [vmem:[#allocation0] sm:$0x1] %vm123, %v122
    %s125 = scalar_lea.vmem %s0, 11
    %v126 = vld [vmem:[%s125] sm:$0x1]
    %127 = vrot.lane.b32.xlu0 %v126, 44
    %v128 = vpop.permute.xlu0 %127
    %vm129 = vcmask 392544
    %130 = vst.msk [vmem:[#allocation0] sm:$0x1] %vm129, %v128
    %s131 = scalar_lea.vmem %s0, 10
    %v132 = vld [vmem:[%s131] sm:$0x1]
    %133 = vrot.lane.b32.xlu0 %v132, 40
    %v134 = vpop.permute.xlu0 %133
    %vm135 = vcmask 359744
    %136 = vst.msk [vmem:[#allocation0] sm:$0x1] %vm135, %v134
    %s137 = scalar_lea.vmem %s0, 9
    %v138 = vld [vmem:[%s137] sm:$0x1]
    %139 = vrot.lane.b32.xlu0 %v138, 36
    %v140 = vpop.permute.xlu0 %139
    %vm141 = vcmask 326944
    %142 = vst.msk [vmem:[#allocation0] sm:$0x1] %vm141, %v140
    %s143 = scalar_lea.vmem %s0, 8
    %v144 = vld [vmem:[%s143] sm:$0x1]
    %145 = vrot.lane.b32.xlu0 %v144, 32
    %v146 = vpop.permute.xlu0 %145
    %vm147 = vcmask 294144
    %148 = vst.msk [vmem:[#allocation0] sm:$0x1] %vm147, %v146
    %s149 = scalar_lea.vmem %s0, 7
    %v150 = vld [vmem:[%s149] sm:$0x1]
    %151 = vrot.lane.b32.xlu0 %v150, 28
    %v152 = vpop.permute.xlu0 %151
    %vm153 = vcmask 261344
    %154 = vst.msk [vmem:[#allocation0] sm:$0x1] %vm153, %v152
    %s155 = scalar_lea.vmem %s0, 6
    %v156 = vld [vmem:[%s155] sm:$0x1]
    %157 = vrot.lane.b32.xlu0 %v156, 24
    %v158 = vpop.permute.xlu0 %157
    %vm159 = vcmask 228544
    %160 = vst.msk [vmem:[#allocation0] sm:$0x1] %vm159, %v158
    %s161 = scalar_lea.vmem %s0, 5
    %v162 = vld [vmem:[%s161] sm:$0x1]
    %163 = vrot.lane.b32.xlu0 %v162, 20
    %v164 = vpop.permute.xlu0 %163
    %vm165 = vcmask 195744
    %166 = vst.msk [vmem:[#allocation0] sm:$0x1] %vm165, %v164
    %s167 = scalar_lea.vmem %s0, 4
    %v168 = vld [vmem:[%s167] sm:$0x1]
    %169 = vrot.lane.b32.xlu0 %v168, 16
    %v170 = vpop.permute.xlu0 %169
    %vm171 = vcmask 162944
    %172 = vst.msk [vmem:[#allocation0] sm:$0x1] %vm171, %v170
    %s173 = scalar_lea.vmem %s0, 3
    %v174 = vld [vmem:[%s173] sm:$0x1]
    %175 = vrot.lane.b32.xlu0 %v174, 12
    %v176 = vpop.permute.xlu0 %175
    %vm177 = vcmask 130144
    %178 = vst.msk [vmem:[#allocation0] sm:$0x1] %vm177, %v176
    %s179 = scalar_lea.vmem %s0, 2
    %v180 = vld [vmem:[%s179] sm:$0x1]
    %181 = vrot.lane.b32.xlu0 %v180, 8
    %v182 = vpop.permute.xlu0 %181
    %vm183 = vcmask 97344
    %184 = vst.msk [vmem:[#allocation0] sm:$0x1] %vm183, %v182
    %s185 = scalar_lea.vmem %s0, 1
    %v186 = vld [vmem:[%s185] sm:$0x1]
    %187 = vrot.lane.b32.xlu0 %v186, 4
    %v188 = vpop.permute.xlu0 %187
    %vm189 = vcmask 64544
    %190 = vst.msk [vmem:[#allocation0] sm:$0x1] %vm189, %v188
    %s192 = ssub.s32 2, 1
    %v193 = vld [vmem:[#allocation0] sm:%s192]
    %s195 = ssub.s32 2, 1
    %196 = vst [vmem:[%s1] sm:%s195] %v193

// kernel: _resblock_impl.2
$region0: #{_resblock_impl.2}
  #allocation0 [shape = 'u32[]', space=smem, size = 0x4, offset = 0x4, fixed_abs, tag = 'smem constant byte address 0x4 - core index']
  #allocation1 [shape = 'u32[72,128]{1,0:T(1,128)}', space=vmem, size = 0x9000, scoped, tag = 'internal scratch']
  %s0 = inlined_call_operand.vmem [shape: f32[16,128], index: 0, kind: input, shape index: {}]
  %s1 = inlined_call_operand.vmem [shape: f32[3,128,128], index: 1, kind: input, shape index: {}]
  %s2 = inlined_call_operand.vmem [shape: f32[1,2,128], index: 2, kind: output, shape index: {}]
  %s3 = sld [smem:[#allocation0]]
  $region18: #{_resblock_impl.2} parent=0
    _
  %s5 = ssub.s32 1, %s3
  %s6 = scalar_select 0, %s5, %s3
  // Predicated region
  $region2: #{_resblock_impl.2} parent=0 // pred_check
    _
  $region3: #{_resblock_impl.2} parent=0 // pred_check_branch
    %8 = sbr.rel (0) target = $region5
  $region4: #{_resblock_impl.2} parent=0 // pred_region
    _
  $region5: #{_resblock_impl.2} parent=0 // pred_fallthru
    _
  // Predicated region
  $region6: #{_resblock_impl.2} parent=0 // pred_check
    _
  $region7: #{_resblock_impl.2} parent=0 // pred_check_branch
    %10 = sbr.rel (0) target = $region9
  $region8: #{_resblock_impl.2} parent=0 // pred_region
    _
  $region9: #{_resblock_impl.2} parent=0 // pred_fallthru
    _
  %v11 = vld [vmem:[%s0] sm:$0xff]
  %v12 = vld [vmem:[%s0 + $0x8] sm:$0xff]
  %vm15 = vcmask 1040384
  %v16 = vrot.slane %v11, 7
  %v17 = vrot.slane %v12, 7
  %v18 = vsel %vm15, %v16, %v17
  %v21 = vsel %vm15, 0.0, %v16
  %vm22 = vcmask 1046528
  %v23 = vrot.slane %v11, 1
  %v24 = vrot.slane %v12, 1
  %v25 = vsel %vm22, %v23, %v24
  %v28 = vsel %vm22, %v24, 0.0
  %v29 = vlaneseq
  %v30 = vshrl.u32 %v29, 7
  %v31 = vadd.s32 %v30, 8
  %vm32 = vcmp.lt.s32.totalorder %v30, 0
  %v33 = vsub.s32 0, %v30
  %v34 = vsel %vm32, %v33, %v30
  %v35 = vshrl.u32 %v34, 3
  %v36 = vand.u32 %v34, 7
  %v37 = vsub.s32 0, %v36
  %v38 = vsel %vm32, %v37, %v36
  %vm39 = vcmp.lt.s32.totalorder %v31, 0
  %v40 = vsub.s32 0, %v31
  %v41 = vsel %vm39, %v40, %v31
  %v42 = vshrl.u32 %v41, 3
  %v43 = vand.u32 %v41, 7
  %v44 = vsub.s32 0, %v43
  %v45 = vsel %vm39, %v44, %v43
  %vm46 = vcmp.ne.s32.totalorder %v38, 0
  %vm47 = vcmp.ne.s32.totalorder %v45, 0
  %vm48 = vcmp.lt.s32.totalorder %v38, 0
  %vm49 = vcmp.lt.s32.totalorder %v45, 0
  %vm50 = vmand %vm48, %vm46
  %vm51 = vmand %vm49, %vm47
  %v52 = vadd.s32 %v38, 8
  %v53 = vadd.s32 %v45, 8
  %v54 = vsel %vm50, %v52, %v38
  %v55 = vsel %vm51, %v53, %v45
  %vm56 = vcmp.eq.s32.totalorder %v54, 0
  %vm57 = vcmp.eq.s32.totalorder %v55, 0
  %v58 = vsel %vm56, 0.0, %v21
  %v59 = vsel %vm57, 0.0, %v18
  %vm60 = vcmp.eq.s32.totalorder %v54, 7
  %vm61 = vcmp.eq.s32.totalorder %v55, 7
  %v62 = vsel %vm60, 0.0, %v25
  %v63 = vsel %vm61, 0.0, %v28
  %v64 = vld [vmem:[%s1] sm:$0xff]
  %v65 = vld [vmem:[%s1 + $0x8] sm:$0xff]
  %v66 = vld [vmem:[%s1 + $0x10] sm:$0xff]
  %v67 = vld [vmem:[%s1 + $0x18] sm:$0xff]
  %v68 = vld [vmem:[%s1 + $0x20] sm:$0xff]
  %v69 = vld [vmem:[%s1 + $0x28] sm:$0xff]
  %v70 = vld [vmem:[%s1 + $0x30] sm:$0xff]
  %v71 = vld [vmem:[%s1 + $0x38] sm:$0xff]
  %v72 = vld [vmem:[%s1 + $0x40] sm:$0xff]
  %v73 = vld [vmem:[%s1 + $0x48] sm:$0xff]
  %v74 = vld [vmem:[%s1 + $0x50] sm:$0xff]
  %v75 = vld [vmem:[%s1 + $0x58] sm:$0xff]
  %v76 = vld [vmem:[%s1 + $0x60] sm:$0xff]
  %v77 = vld [vmem:[%s1 + $0x68] sm:$0xff]
  %v78 = vld [vmem:[%s1 + $0x70] sm:$0xff]
  %v79 = vld [vmem:[%s1 + $0x78] sm:$0xff]
  %s80 = scalar_lea.vmem %s1, 128
  %v81 = vld [vmem:[%s80] sm:$0xff]
  %v82 = vld [vmem:[%s80 + $0x8] sm:$0xff]
  %v83 = vld [vmem:[%s80 + $0x10] sm:$0xff]
  %v84 = vld [vmem:[%s80 + $0x18] sm:$0xff]
  %v85 = vld [vmem:[%s80 + $0x20] sm:$0xff]
  %v86 = vld [vmem:[%s80 + $0x28] sm:$0xff]
  %v87 = vld [vmem:[%s80 + $0x30] sm:$0xff]
  %v88 = vld [vmem:[%s80 + $0x38] sm:$0xff]
  %v89 = vld [vmem:[%s80 + $0x40] sm:$0xff]
  %v90 = vld [vmem:[%s80 + $0x48] sm:$0xff]
  %v91 = vld [vmem:[%s80 + $0x50] sm:$0xff]
  %v92 = vld [vmem:[%s80 + $0x58] sm:$0xff]
  %v93 = vld [vmem:[%s80 + $0x60] sm:$0xff]
  %v94 = vld [vmem:[%s80 + $0x68] sm:$0xff]
  %v95 = vld [vmem:[%s80 + $0x70] sm:$0xff]
  %v96 = vld [vmem:[%s80 + $0x78] sm:$0xff]
  %97 = vmatpush.msra.mxu0 %v96
  %98 = vmatpush.msra.mxu0 %v95
  %99 = vmatpush.msra.mxu0 %v94
  %100 = vmatpush.msra.mxu0 %v93
  %101 = vmatpush.msra.mxu0 %v92
  %102 = vmatpush.msra.mxu0 %v91
  %103 = vmatpush.msra.mxu0 %v90
  %104 = vmatpush.msra.mxu0 %v89
  %105 = vmatpush.msra.mxu0 %v88
  %106 = vmatpush.msra.mxu0 %v87
  %107 = vmatpush.msra.mxu0 %v86
  %108 = vmatpush.msra.mxu0 %v85
  %109 = vmatpush.msra.mxu0 %v84
  %110 = vmatpush.msra.mxu0 %v83
  %111 = vmatpush.msra.mxu0 %v82
  %112 = vmatpush.msra.mxu0 %v81
  %113 = vmatmul.f32.gmra.mxu0 %v11
  %v114 = vpop.f32.mrf.mxu0
  %v115 = vadd.f32 0.0, %v114
  %116 = vmatmul.f32.gmra.mxu0 %v12
  %v117 = vpop.f32.mrf.mxu0
  %v118 = vadd.f32 0.0, %v117
  %119 = vdwg.mxu0
  %120 = vmatpush.msra.mxu0 %v79
  %121 = vmatpush.msra.mxu0 %v78
  %122 = vmatpush.msra.mxu0 %v77
  %123 = vmatpush.msra.mxu0 %v76
  %124 = vmatpush.msra.mxu0 %v75
  %125 = vmatpush.msra.mxu0 %v74
  %126 = vmatpush.msra.mxu0 %v73
  %127 = vmatpush.msra.mxu0 %v72
  %128 = vmatpush.msra.mxu0 %v71
  %129 = vmatpush.msra.mxu0 %v70
  %130 = vmatpush.msra.mxu0 %v69
  %131 = vmatpush.msra.mxu0 %v68
  %132 = vmatpush.msra.mxu0 %v67
  %133 = vmatpush.msra.mxu0 %v66
  %134 = vmatpush.msra.mxu0 %v65
  %135 = vmatpush.msra.mxu0 %v64
  %136 = vmatmul.f32.gmra.mxu0 %v58
  %v137 = vpop.f32.mrf.mxu0
  %v138 = vadd.f32 %v115, %v137
  %139 = vmatmul.f32.gmra.mxu0 %v59
  %v140 = vpop.f32.mrf.mxu0
  %v141 = vadd.f32 %v118, %v140
  %142 = vdwg.mxu0
  %s143 = scalar_lea.vmem %s1, 256
  %v144 = vld [vmem:[%s143] sm:$0xff]
  %v145 = vld [vmem:[%s143 + $0x8] sm:$0xff]
  %v146 = vld [vmem:[%s143 + $0x10] sm:$0xff]
  %v147 = vld [vmem:[%s143 + $0x18] sm:$0xff]
  %v148 = vld [vmem:[%s143 + $0x20] sm:$0xff]
  %v149 = vld [vmem:[%s143 + $0x28] sm:$0xff]
  %v150 = vld [vmem:[%s143 + $0x30] sm:$0xff]
  %v151 = vld [vmem:[%s143 + $0x38] sm:$0xff]
  %v152 = vld [vmem:[%s143 + $0x40] sm:$0xff]
  %v153 = vld [vmem:[%s143 + $0x48] sm:$0xff]
  %v154 = vld [vmem:[%s143 + $0x50] sm:$0xff]
  %v155 = vld [vmem:[%s143 + $0x58] sm:$0xff]
  %v156 = vld [vmem:[%s143 + $0x60] sm:$0xff]
  %v157 = vld [vmem:[%s143 + $0x68] sm:$0xff]
  %v158 = vld [vmem:[%s143 + $0x70] sm:$0xff]
  %v159 = vld [vmem:[%s143 + $0x78] sm:$0xff]
  %160 = vmatpush.msra.mxu0 %v159
  %161 = vmatpush.msra.mxu0 %v158
  %162 = vmatpush.msra.mxu0 %v157
  %163 = vmatpush.msra.mxu0 %v156
  %164 = vmatpush.msra.mxu0 %v155
  %165 = vmatpush.msra.mxu0 %v154
  %166 = vmatpush.msra.mxu0 %v153
  %167 = vmatpush.msra.mxu0 %v152
  %168 = vmatpush.msra.mxu0 %v151
  %169 = vmatpush.msra.mxu0 %v150
  %170 = vmatpush.msra.mxu0 %v149
  %171 = vmatpush.msra.mxu0 %v148
  %172 = vmatpush.msra.mxu0 %v147
  %173 = vmatpush.msra.mxu0 %v146
  %174 = vmatpush.msra.mxu0 %v145
  %175 = vmatpush.msra.mxu0 %v144
  %176 = vmatmul.f32.gmra.mxu0 %v62
  %v177 = vpop.f32.mrf.mxu0
  %v178 = vadd.f32 0.0, %v177
  %179 = vmatmul.f32.gmra.mxu0 %v63
  %v180 = vpop.f32.mrf.mxu0
  %v181 = vadd.f32 0.0, %v180
  %182 = vdwg.mxu0
  %v183 = vadd.f32 %v138, %v178
  %v184 = vadd.f32 %v141, %v181
  %v185 = vadd.f32 %v183, %v184
  %v186 = vrot.slane %v185, 4
  %v187 = vadd.f32 %v185, %v186
  %v188 = vrot.slane %v187, 2
  %v189 = vadd.f32 %v187, %v188
  %v190 = vrot.slane %v189, 1
  %v191 = vadd.f32 %v189, %v190
  %v192 = vmul.f32 %v183, %v183
  %v193 = vmul.f32 %v184, %v184
  %v194 = vadd.f32 %v192, %v193
  %v195 = vrot.slane %v194, 4
  %v196 = vadd.f32 %v194, %v195
  %v197 = vrot.slane %v196, 2
  %v198 = vadd.f32 %v196, %v197
  %v199 = vrot.slane %v198, 1
  %v200 = vadd.f32 %v198, %v199
  %v201 = vsel %vm15, %v191, %v200
  %202 = vst [vmem:[%s2] sm:$0x3] %v201
  // Predicated region
  $region10: #{_resblock_impl.2} parent=0 // pred_check
    _
  $region11: #{_resblock_impl.2} parent=0 // pred_check_branch
    %204 = sbr.rel (0) target = $region13
  $region12: #{_resblock_impl.2} parent=0 // pred_region
    _
  $region13: #{_resblock_impl.2} parent=0 // pred_fallthru
    _
  // Predicated region
  $region14: #{_resblock_impl.2} parent=0 // pred_check
    _
  $region15: #{_resblock_impl.2} parent=0 // pred_check_branch
    %206 = sbr.rel (0) target = $region17
  $region16: #{_resblock_impl.2} parent=0 // pred_region
    _
  $region17: #{_resblock_impl.2} parent=0 // pred_fallthru
    _

// kernel: _resblock_impl.3
$region0: #{_resblock_impl.3}
  #allocation0 [shape = 'u32[]', space=smem, size = 0x4, offset = 0x4, fixed_abs, tag = 'smem constant byte address 0x4 - core index']
  #allocation1 [shape = 'u32[72,128]{1,0:T(1,128)}', space=vmem, size = 0x9000, scoped, tag = 'internal scratch']
  %s0 = inlined_call_operand.vmem [shape: f32[16,128], index: 0, kind: input, shape index: {}]
  %s1 = inlined_call_operand.vmem [shape: f32[3,128,128], index: 1, kind: input, shape index: {}]
  %s2 = inlined_call_operand.vmem [shape: f32[1,128], index: 2, kind: input, shape index: {}]
  %s3 = inlined_call_operand.vmem [shape: f32[1,128], index: 3, kind: input, shape index: {}]
  %s4 = inlined_call_operand.vmem [shape: f32[16,128], index: 4, kind: output, shape index: {}]
  %s5 = sld [smem:[#allocation0]]
  $region26: #{_resblock_impl.3} parent=0
    _
  %s7 = ssub.s32 1, %s5
  %s8 = scalar_select 0, %s7, %s5
  // Predicated region
  $region2: #{_resblock_impl.3} parent=0 // pred_check
    _
  $region3: #{_resblock_impl.3} parent=0 // pred_check_branch
    %10 = sbr.rel (0) target = $region5
  $region4: #{_resblock_impl.3} parent=0 // pred_region
    _
  $region5: #{_resblock_impl.3} parent=0 // pred_fallthru
    _
  // Predicated region
  $region6: #{_resblock_impl.3} parent=0 // pred_check
    _
  $region7: #{_resblock_impl.3} parent=0 // pred_check_branch
    %12 = sbr.rel (0) target = $region9
  $region8: #{_resblock_impl.3} parent=0 // pred_region
    _
  $region9: #{_resblock_impl.3} parent=0 // pred_fallthru
    _
  // Predicated region
  $region10: #{_resblock_impl.3} parent=0 // pred_check
    _
  $region11: #{_resblock_impl.3} parent=0 // pred_check_branch
    %14 = sbr.rel (0) target = $region13
  $region12: #{_resblock_impl.3} parent=0 // pred_region
    _
  $region13: #{_resblock_impl.3} parent=0 // pred_fallthru
    _
  // Predicated region
  $region14: #{_resblock_impl.3} parent=0 // pred_check
    _
  $region15: #{_resblock_impl.3} parent=0 // pred_check_branch
    %16 = sbr.rel (0) target = $region17
  $region16: #{_resblock_impl.3} parent=0 // pred_region
    _
  $region17: #{_resblock_impl.3} parent=0 // pred_fallthru
    _
  %v17 = vld [vmem:[%s0] sm:$0xff]
  %v18 = vld [vmem:[%s0 + $0x8] sm:$0xff]
  %vm21 = vcmask 1040384
  %v22 = vrot.slane %v17, 7
  %v23 = vrot.slane %v18, 7
  %v24 = vsel %vm21, %v22, %v23
  %v27 = vsel %vm21, 0.0, %v22
  %vm28 = vcmask 1046528
  %v29 = vrot.slane %v17, 1
  %v30 = vrot.slane %v18, 1
  %v31 = vsel %vm28, %v29, %v30
  %v34 = vsel %vm28, %v30, 0.0
  %v35 = vlaneseq
  %v36 = vshrl.u32 %v35, 7
  %v37 = vadd.s32 %v36, 8
  %vm38 = vcmp.lt.s32.totalorder %v36, 0
  %v39 = vsub.s32 0, %v36
  %v40 = vsel %vm38, %v39, %v36
  %v41 = vshrl.u32 %v40, 3
  %v42 = vand.u32 %v40, 7
  %v43 = vsub.s32 0, %v42
  %v44 = vsel %vm38, %v43, %v42
  %vm45 = vcmp.lt.s32.totalorder %v37, 0
  %v46 = vsub.s32 0, %v37
  %v47 = vsel %vm45, %v46, %v37
  %v48 = vshrl.u32 %v47, 3
  %v49 = vand.u32 %v47, 7
  %v50 = vsub.s32 0, %v49
  %v51 = vsel %vm45, %v50, %v49
  %vm52 = vcmp.ne.s32.totalorder %v44, 0
  %vm53 = vcmp.ne.s32.totalorder %v51, 0
  %vm54 = vcmp.lt.s32.totalorder %v44, 0
  %vm55 = vcmp.lt.s32.totalorder %v51, 0
  %vm56 = vmand %vm54, %vm52
  %vm57 = vmand %vm55, %vm53
  %v58 = vadd.s32 %v44, 8
  %v59 = vadd.s32 %v51, 8
  %v60 = vsel %vm56, %v58, %v44
  %v61 = vsel %vm57, %v59, %v51
  %vm62 = vcmp.eq.s32.totalorder %v60, 0
  %vm63 = vcmp.eq.s32.totalorder %v61, 0
  %v64 = vsel %vm62, 0.0, %v27
  %v65 = vsel %vm63, 0.0, %v24
  %vm66 = vcmp.eq.s32.totalorder %v60, 7
  %vm67 = vcmp.eq.s32.totalorder %v61, 7
  %v68 = vsel %vm66, 0.0, %v31
  %v69 = vsel %vm67, 0.0, %v34
  %v70 = vld [vmem:[%s1] sm:$0xff]
  %v71 = vld [vmem:[%s1 + $0x8] sm:$0xff]
  %v72 = vld [vmem:[%s1 + $0x10] sm:$0xff]
  %v73 = vld [vmem:[%s1 + $0x18] sm:$0xff]
  %v74 = vld [vmem:[%s1 + $0x20] sm:$0xff]
  %v75 = vld [vmem:[%s1 + $0x28] sm:$0xff]
  %v76 = vld [vmem:[%s1 + $0x30] sm:$0xff]
  %v77 = vld [vmem:[%s1 + $0x38] sm:$0xff]
  %v78 = vld [vmem:[%s1 + $0x40] sm:$0xff]
  %v79 = vld [vmem:[%s1 + $0x48] sm:$0xff]
  %v80 = vld [vmem:[%s1 + $0x50] sm:$0xff]
  %v81 = vld [vmem:[%s1 + $0x58] sm:$0xff]
  %v82 = vld [vmem:[%s1 + $0x60] sm:$0xff]
  %v83 = vld [vmem:[%s1 + $0x68] sm:$0xff]
  %v84 = vld [vmem:[%s1 + $0x70] sm:$0xff]
  %v85 = vld [vmem:[%s1 + $0x78] sm:$0xff]
  %s86 = scalar_lea.vmem %s1, 128
  %v87 = vld [vmem:[%s86] sm:$0xff]
  %v88 = vld [vmem:[%s86 + $0x8] sm:$0xff]
  %v89 = vld [vmem:[%s86 + $0x10] sm:$0xff]
  %v90 = vld [vmem:[%s86 + $0x18] sm:$0xff]
  %v91 = vld [vmem:[%s86 + $0x20] sm:$0xff]
  %v92 = vld [vmem:[%s86 + $0x28] sm:$0xff]
  %v93 = vld [vmem:[%s86 + $0x30] sm:$0xff]
  %v94 = vld [vmem:[%s86 + $0x38] sm:$0xff]
  %v95 = vld [vmem:[%s86 + $0x40] sm:$0xff]
  %v96 = vld [vmem:[%s86 + $0x48] sm:$0xff]
  %v97 = vld [vmem:[%s86 + $0x50] sm:$0xff]
  %v98 = vld [vmem:[%s86 + $0x58] sm:$0xff]
  %v99 = vld [vmem:[%s86 + $0x60] sm:$0xff]
  %v100 = vld [vmem:[%s86 + $0x68] sm:$0xff]
  %v101 = vld [vmem:[%s86 + $0x70] sm:$0xff]
  %v102 = vld [vmem:[%s86 + $0x78] sm:$0xff]
  %103 = vmatpush.msra.mxu0 %v102
  %104 = vmatpush.msra.mxu0 %v101
  %105 = vmatpush.msra.mxu0 %v100
  %106 = vmatpush.msra.mxu0 %v99
  %107 = vmatpush.msra.mxu0 %v98
  %108 = vmatpush.msra.mxu0 %v97
  %109 = vmatpush.msra.mxu0 %v96
  %110 = vmatpush.msra.mxu0 %v95
  %111 = vmatpush.msra.mxu0 %v94
  %112 = vmatpush.msra.mxu0 %v93
  %113 = vmatpush.msra.mxu0 %v92
  %114 = vmatpush.msra.mxu0 %v91
  %115 = vmatpush.msra.mxu0 %v90
  %116 = vmatpush.msra.mxu0 %v89
  %117 = vmatpush.msra.mxu0 %v88
  %118 = vmatpush.msra.mxu0 %v87
  %119 = vmatmul.f32.gmra.mxu0 %v17
  %v120 = vpop.f32.mrf.mxu0
  %v121 = vadd.f32 0.0, %v120
  %122 = vmatmul.f32.gmra.mxu0 %v18
  %v123 = vpop.f32.mrf.mxu0
  %v124 = vadd.f32 0.0, %v123
  %125 = vdwg.mxu0
  %126 = vmatpush.msra.mxu0 %v85
  %127 = vmatpush.msra.mxu0 %v84
  %128 = vmatpush.msra.mxu0 %v83
  %129 = vmatpush.msra.mxu0 %v82
  %130 = vmatpush.msra.mxu0 %v81
  %131 = vmatpush.msra.mxu0 %v80
  %132 = vmatpush.msra.mxu0 %v79
  %133 = vmatpush.msra.mxu0 %v78
  %134 = vmatpush.msra.mxu0 %v77
  %135 = vmatpush.msra.mxu0 %v76
  %136 = vmatpush.msra.mxu0 %v75
  %137 = vmatpush.msra.mxu0 %v74
  %138 = vmatpush.msra.mxu0 %v73
  %139 = vmatpush.msra.mxu0 %v72
  %140 = vmatpush.msra.mxu0 %v71
  %141 = vmatpush.msra.mxu0 %v70
  %142 = vmatmul.f32.gmra.mxu0 %v64
  %v143 = vpop.f32.mrf.mxu0
  %v144 = vadd.f32 %v121, %v143
  %145 = vmatmul.f32.gmra.mxu0 %v65
  %v146 = vpop.f32.mrf.mxu0
  %v147 = vadd.f32 %v124, %v146
  %148 = vdwg.mxu0
  %s149 = scalar_lea.vmem %s1, 256
  %v150 = vld [vmem:[%s149] sm:$0xff]
  %v151 = vld [vmem:[%s149 + $0x8] sm:$0xff]
  %v152 = vld [vmem:[%s149 + $0x10] sm:$0xff]
  %v153 = vld [vmem:[%s149 + $0x18] sm:$0xff]
  %v154 = vld [vmem:[%s149 + $0x20] sm:$0xff]
  %v155 = vld [vmem:[%s149 + $0x28] sm:$0xff]
  %v156 = vld [vmem:[%s149 + $0x30] sm:$0xff]
  %v157 = vld [vmem:[%s149 + $0x38] sm:$0xff]
  %v158 = vld [vmem:[%s149 + $0x40] sm:$0xff]
  %v159 = vld [vmem:[%s149 + $0x48] sm:$0xff]
  %v160 = vld [vmem:[%s149 + $0x50] sm:$0xff]
  %v161 = vld [vmem:[%s149 + $0x58] sm:$0xff]
  %v162 = vld [vmem:[%s149 + $0x60] sm:$0xff]
  %v163 = vld [vmem:[%s149 + $0x68] sm:$0xff]
  %v164 = vld [vmem:[%s149 + $0x70] sm:$0xff]
  %v165 = vld [vmem:[%s149 + $0x78] sm:$0xff]
  %166 = vmatpush.msra.mxu0 %v165
  %167 = vmatpush.msra.mxu0 %v164
  %168 = vmatpush.msra.mxu0 %v163
  %169 = vmatpush.msra.mxu0 %v162
  %170 = vmatpush.msra.mxu0 %v161
  %171 = vmatpush.msra.mxu0 %v160
  %172 = vmatpush.msra.mxu0 %v159
  %173 = vmatpush.msra.mxu0 %v158
  %174 = vmatpush.msra.mxu0 %v157
  %175 = vmatpush.msra.mxu0 %v156
  %176 = vmatpush.msra.mxu0 %v155
  %177 = vmatpush.msra.mxu0 %v154
  %178 = vmatpush.msra.mxu0 %v153
  %179 = vmatpush.msra.mxu0 %v152
  %180 = vmatpush.msra.mxu0 %v151
  %181 = vmatpush.msra.mxu0 %v150
  %182 = vmatmul.f32.gmra.mxu0 %v68
  %v183 = vpop.f32.mrf.mxu0
  %v184 = vadd.f32 0.0, %v183
  %185 = vmatmul.f32.gmra.mxu0 %v69
  %v186 = vpop.f32.mrf.mxu0
  %v187 = vadd.f32 0.0, %v186
  %188 = vdwg.mxu0
  %v189 = vadd.f32 %v144, %v184
  %v190 = vadd.f32 %v147, %v187
  %v191 = vld [vmem:[%s2] sm:$0x1]
  %v193 = vperm.slane %v191, 0
  %v195 = vmul.f32 %v189, %v193
  %v196 = vmul.f32 %v190, %v193
  %v197 = vld [vmem:[%s3] sm:$0x1]
  %v199 = vperm.slane %v197, 0
  %v201 = vadd.f32 %v195, %v199
  %v202 = vadd.f32 %v196, %v199
  %v203 = vmax.f32 %v201, 0.0
  %v204 = vmax.f32 %v202, 0.0
  %v205 = vadd.f32 %v203, %v17
  %v206 = vadd.f32 %v204, %v18
  %207 = vst [vmem:[%s4] sm:$0xff] %v205
  %208 = vst [vmem:[%s4 + $0x8] sm:$0xff] %v206
  // Predicated region
  $region18: #{_resblock_impl.3} parent=0 // pred_check
    _
  $region19: #{_resblock_impl.3} parent=0 // pred_check_branch
    %210 = sbr.rel (0) target = $region21
  $region20: #{_resblock_impl.3} parent=0 // pred_region
    _
  $region21: #{_resblock_impl.3} parent=0 // pred_fallthru
    _
  // Predicated region
  $region22: #{_resblock_impl.3} parent=0 // pred_check
    _
  $region23: #{_resblock_impl.3} parent=0 // pred_check_branch
    %212 = sbr.rel (0) target = $region25
  $region24: #{_resblock_impl.3} parent=0 // pred_region
    _
  $region25: #{_resblock_impl.3} parent=0 // pred_fallthru
    _

</llo_original>
